<compile_context>
chip_gen: v7x
topology: tpu7x:2x2x1
jax: 0.10.0
libtpu: 0.0.40
codegen_flags: <defaults>
</compile_context>

<pallas_src>
import functools
import math

import jax
import jax.numpy as jnp
import numpy as np
from jax.experimental import pallas as pl
from jax.experimental.pallas import tpu as pltpu


# --------------------------------------------------------------------------------------
# Kernel
# --------------------------------------------------------------------------------------
def _fourier_block_kernel(x_ref, krki_ref, csw1_ref, w2b_ref, vec_ref, o_ref,
                          *, B, C, BM, HW, inv_n):
    """Fused FourierBlock on a flattened-NCHW slab x of shape (B*C, H*W).

    Operands (all full VMEM-resident blocks, grid=(1,)):
      x_ref    : (B*C, HW)          f32   activations
      krki_ref : (HW, 2*HW)         bf16  [Kr | Ki] 2-D DFT (Kronecker) weights, K-stacked
      csw1_ref : (2*B*C+B*M, B*C)   f32   rows [0,BC)=I(x)Cc, [BC,2BC)=I(x)Sc, rest=I(x)W1
      w2b_ref  : (B*C, B*M)         f32   I(x)W2
      vec_ref  : (3*B*C+B*M, 1)     f32   rows: gamma | beta | b1 | b2  (per-row columns)
    """
    BC = B * C
    x = x_ref[...]                                                      # (BC, HW)

    # ---- 2-D spatial DFT: ONE K-stacked MXU pass, z = x @ [Kr | Ki] -------------------
    # bf16 storage halves the dominant HBM->VMEM DMA; up-cast keeps f32 accumulation.
    krki = krki_ref[...].astype(jnp.float32)                            # (HW, 2*HW)
    z = jnp.dot(x, krki, preferred_element_type=jnp.float32)            # (BC, 2*HW)
    zr = z[:, :HW]                                                      # free 128-aligned
    zi = z[:, HW:]                                                      #   lane slices

    # ---- channel DFT (real part): y = (I(x)Cc) zr + (I(x)Sc) zi -----------------------
    # (no axis-0 concat of [zr; zi]; weights are static sublane slices of one slab)
    csw1 = csw1_ref[...]
    cc_blk = csw1[0:BC, :]                                              # (BC, BC)
    sc_blk = csw1[BC:2 * BC, :]                                         # (BC, BC)
    w1_blk = csw1[2 * BC:, :]                                           # (BM, BC)
    y = (jnp.dot(cc_blk, zr, preferred_element_type=jnp.float32)
         + jnp.dot(sc_blk, zi, preferred_element_type=jnp.float32))     # (BC, HW)

    # ---- BatchNorm2d (training mode: biased batch stats over (B,H,W), eps=1e-5) -------
    # Cross-batch channel sums = static sublane-slice adds (no (BC,BC) matmul operand);
    # two-pass variance for numerical robustness.
    vec = vec_ref[...]
    gamma = vec[0:BC, :]                                                # (BC, 1)
    beta = vec[BC:2 * BC, :]                                            # (BC, 1)
    b1 = vec[2 * BC:2 * BC + BM, :]                                     # (BM, 1)
    b2 = vec[2 * BC + BM:, :]                                           # (BC, 1)

    rs = jnp.sum(y, axis=1, keepdims=True)                              # (BC, 1) lane reduce
    csum = rs[0:C, :]
    for kb in range(1, B):                                              # static unroll
        csum = csum + rs[kb * C:(kb + 1) * C, :]
    mean = jnp.concatenate([csum * inv_n] * B, axis=0)                  # (BC, 1) per row

    d = y - mean                                                        # (BC, HW)
    rq = jnp.sum(d * d, axis=1, keepdims=True)                          # (BC, 1)
    cq = rq[0:C, :]
    for kb in range(1, B):
        cq = cq + rq[kb * C:(kb + 1) * C, :]
    var = jnp.concatenate([cq * inv_n] * B, axis=0)                     # (BC, 1)

    s = gamma * jax.lax.rsqrt(var + 1e-5)
    xn = d * s + beta                                                   # single FMA pass

    # ---- Conv1x1 -> GELU(tanh approx, EUP) -> Conv1x1 ---------------------------------
    h = jnp.dot(w1_blk, xn, preferred_element_type=jnp.float32) + b1    # (BM, HW)
    h = 0.5 * h * (1.0 + jnp.tanh(0.7978845608028654
                                  * (h + 0.044715 * (h * h * h))))
    o_ref[...] = jnp.dot(w2b_ref[...], h, preferred_element_type=jnp.float32) + b2


# --------------------------------------------------------------------------------------
# Host-side, one-time constant construction (numpy; never rebuilt per call)
# --------------------------------------------------------------------------------------
def _dft_mats_np(n):
    # DFT matrix F[k, m] = exp(-2*pi*i*k*m/n) = C[k, m] - i * S[k, m]  (both symmetric)
    k = np.arange(n, dtype=np.float64)
    theta = (2.0 * np.pi / n) * np.outer(k, k)
    return np.cos(theta), np.sin(theta)


def build_fourier_block_constants(params, B, H, W):
    """One-time host-side construction of all kernel operands (weights/constants)."""
    gamma, beta, w1, b1, w2, b2 = [np.asarray(p, dtype=np.float64) for p in params]
    M, C = w1.shape
    HW = H * W
    # static-slice alignment inside the kernel (sublanes: multiples of 8; lanes: 128)
    assert C % 8 == 0 and (B * C) % 8 == 0 and (B * M) % 8 == 0 and HW % 128 == 0

    cw, sw = _dft_mats_np(W)
    ch, sh = _dft_mats_np(H)
    cc, sc = _dft_mats_np(C)

    # 2-D DFT over (H, W) as Kronecker matmuls on row-major-flattened (H*W) slabs,
    # K-stacked along lanes:  z = x @ [Kr | Ki].   Stored bf16 (f32 accumulation in-kernel).
    kr = np.kron(ch, cw) - np.kron(sh, sw)
    ki = -(np.kron(ch, sw) + np.kron(sh, cw))
    krki = jnp.asarray(np.concatenate([kr, ki], axis=1), dtype=jnp.bfloat16)   # (HW, 2*HW)

    eye_b = np.eye(B)
    # channel-DFT(real) weights + first conv weight, sublane-stacked into one slab
    csw1 = np.concatenate([np.kron(eye_b, cc),            # (B*C, B*C)
                           np.kron(eye_b, sc),            # (B*C, B*C)
                           np.kron(eye_b, w1)], axis=0)   # (B*M, B*C)
    csw1 = jnp.asarray(csw1, dtype=jnp.float32)
    w2b = jnp.asarray(np.kron(eye_b, w2), dtype=jnp.float32)                   # (B*C, B*M)
    # per-row column vectors, packed into ONE (3*B*C + B*M, 1) slab (single DMA)
    vec = np.concatenate([np.tile(gamma, B), np.tile(beta, B),
                          np.tile(b1, B), np.tile(b2, B)]).reshape(-1, 1)
    vec = jnp.asarray(vec, dtype=jnp.float32)
    return krki, csw1, w2b, vec


def _full_spec(shape):
    nd = len(shape)
    return pl.BlockSpec(shape, lambda i, _nd=nd: (0,) * _nd)


@jax.jit
def fourier_block(x, consts):
    """x: (B, C, H, W) float32 NCHW. consts: build_fourier_block_constants(...)."""
    krki, csw1, w2b, vec = consts
    B, C, H, W = x.shape
    HW = H * W
    BC = B * C
    BM = w2b.shape[1]

    x2d = x.reshape(BC, HW)                                  # free reshape (no transpose)
    kernel = functools.partial(_fourier_block_kernel, B=B, C=C, BM=BM, HW=HW,
                               inv_n=1.0 / float(B * HW))

    out2d = pl.pallas_call(
        kernel,
        out_shape=jax.ShapeDtypeStruct((BC, HW), jnp.float32),
        grid=(1,),
        in_specs=[_full_spec((BC, HW)),            # x
                  _full_spec((HW, 2 * HW)),        # [Kr | Ki]   (bf16)
                  _full_spec((2 * BC + BM, BC)),   # [I(x)Cc ; I(x)Sc ; I(x)W1]
                  _full_spec((BC, BM)),            # I(x)W2
                  _full_spec((3 * BC + BM, 1))],   # gamma | beta | b1 | b2
        out_specs=_full_spec((BC, HW)),
        compiler_params=pltpu.CompilerParams(dimension_semantics=("arbitrary",)),
    )(x2d, krki, csw1, w2b, vec)
    return out2d.reshape(B, C, H, W)                         # free reshape back to NCHW


# --------------------------------------------------------------------------------------
# Pure-JAX reference mirroring the PyTorch forward (exact-erf GELU), for the sanity check
# --------------------------------------------------------------------------------------
def reference(x, params):
    gamma, beta, w1, b1, w2, b2 = params
    xf = jnp.real(jnp.fft.fft(jnp.fft.fft2(x), axis=1)).astype(jnp.float32)
    mean = xf.mean(axis=(0, 2, 3), keepdims=True)
    var = ((xf - mean) ** 2).mean(axis=(0, 2, 3), keepdims=True)
    xn = (xf - mean) / jnp.sqrt(var + 1e-5)
    xn = xn * gamma.reshape(1, -1, 1, 1) + beta.reshape(1, -1, 1, 1)
    hp = jax.lax.Precision.HIGHEST
    h = jnp.einsum('oc,bchw->bohw', w1, xn, precision=hp) + b1.reshape(1, -1, 1, 1)
    h = 0.5 * h * (1.0 + jax.scipy.special.erf(h / jnp.sqrt(2.0)))
    o = jnp.einsum('oc,bchw->bohw', w2, h, precision=hp) + b2.reshape(1, -1, 1, 1)
    return o


if __name__ == "__main__":
    dim, mlp_dim = 16, 32        # FourierBlock defaults
    B, H, W = 2, 16, 16

    key = jax.random.PRNGKey(0)
    kx, k1, k2, k3, k4 = jax.random.split(key, 5)
    x = jax.random.normal(kx, (B, dim, H, W), dtype=jnp.float32)

    # deterministic parameter init (Conv2d-like uniform ranges); BN: weight=1, bias=0
    bnd1 = 1.0 / math.sqrt(dim)
    w1 = jax.random.uniform(k1, (mlp_dim, dim), jnp.float32, -bnd1, bnd1)   # Conv2d(dim, mlp_dim, 1)
    b1 = jax.random.uniform(k2, (mlp_dim,), jnp.float32, -bnd1, bnd1)
    bnd2 = 1.0 / math.sqrt(mlp_dim)
    w2 = jax.random.uniform(k3, (dim, mlp_dim), jnp.float32, -bnd2, bnd2)   # Conv2d(mlp_dim, dim, 1)
    b2 = jax.random.uniform(k4, (dim,), jnp.float32, -bnd2, bnd2)
    gamma = jnp.ones((dim,), jnp.float32)
    beta = jnp.zeros((dim,), jnp.float32)
    params = (gamma, beta, w1, b1, w2, b2)

    # One-time host-side constant construction (not rebuilt per forward call).
    consts = build_fourier_block_constants(params, B, H, W)

    out = jax.block_until_ready(fourier_block(x, consts))
    ref = jax.block_until_ready(reference(x, params))

    assert out.shape == (B, dim, H, W) and out.dtype == jnp.float32
    assert bool(jnp.all(jnp.isfinite(out)))
    np.testing.assert_allclose(np.asarray(out), np.asarray(ref), rtol=1e-2, atol=1e-2)
    print("KERNEL_OK")
</pallas_src>

<mosaic_0001>
module attributes {stable_mosaic.version = 11 : i64} {
  func.func @_fourier_block_kernel(%arg0: i32, %arg1: memref<32x256xf32, #tpu.memory_space<vmem>>, %arg2: memref<256x512xbf16, #tpu.memory_space<vmem>>, %arg3: memref<128x32xf32, #tpu.memory_space<vmem>>, %arg4: memref<32x64xf32, #tpu.memory_space<vmem>>, %arg5: memref<160x1xf32, #tpu.memory_space<vmem>>, %arg6: memref<32x256xf32, #tpu.memory_space<vmem>>) attributes {dimension_semantics = [#tpu.dimension_semantics<arbitrary>], iteration_bounds = array<i64: 1>, scalar_prefetch = 0 : i64, scratch_operands = 0 : i64, tpu.core_type = #tpu.core_type<tc>, window_params = [{pipeline_mode = #tpu.pipeline_mode<synchronous>, transform_indices = @transform_0, window_bounds = array<i64: 32, 256>}, {pipeline_mode = #tpu.pipeline_mode<synchronous>, transform_indices = @transform_1, window_bounds = array<i64: 256, 512>}, {pipeline_mode = #tpu.pipeline_mode<synchronous>, transform_indices = @transform_2, window_bounds = array<i64: 128, 32>}, {pipeline_mode = #tpu.pipeline_mode<synchronous>, transform_indices = @transform_3, window_bounds = array<i64: 32, 64>}, {pipeline_mode = #tpu.pipeline_mode<synchronous>, transform_indices = @transform_4, window_bounds = array<i64: 160, 1>}, {pipeline_mode = #tpu.pipeline_mode<synchronous>, transform_indices = @transform_5, window_bounds = array<i64: 32, 256>}]} {
    %c0 = arith.constant 0 : index
    %c0_0 = arith.constant 0 : index
    %0 = vector.load %arg1[%c0, %c0_0] : memref<32x256xf32, #tpu.memory_space<vmem>>, vector<32x256xf32>
    %c0_1 = arith.constant 0 : index
    %c0_2 = arith.constant 0 : index
    %1 = vector.load %arg2[%c0_1, %c0_2] : memref<256x512xbf16, #tpu.memory_space<vmem>>, vector<256x512xbf16>
    %2 = arith.extf %1 : vector<256x512xbf16> to vector<256x512xf32>
    %cst = arith.constant dense<0.000000e+00> : vector<32x512xf32>
    %3 = tpu.matmul %0, %2, %cst {dimension_numbers = #tpu.dot_dimension_numbers<[1], [0], [0], [1], [0, 0, 1, 1], [], []>} : vector<32x256xf32>, vector<256x512xf32>, vector<32x512xf32> -> vector<32x512xf32>
    %4 = vector.extract_strided_slice %3 {offsets = [0, 0], sizes = [32, 256], strides = [1, 1]} : vector<32x512xf32> to vector<32x256xf32>
    %5 = vector.extract_strided_slice %3 {offsets = [0, 256], sizes = [32, 256], strides = [1, 1]} : vector<32x512xf32> to vector<32x256xf32>
    %c0_3 = arith.constant 0 : index
    %c0_4 = arith.constant 0 : index
    %6 = vector.load %arg3[%c0_3, %c0_4] : memref<128x32xf32, #tpu.memory_space<vmem>>, vector<128x32xf32>
    %7 = vector.extract_strided_slice %6 {offsets = [0, 0], sizes = [32, 32], strides = [1, 1]} : vector<128x32xf32> to vector<32x32xf32>
    %8 = vector.extract_strided_slice %6 {offsets = [32, 0], sizes = [32, 32], strides = [1, 1]} : vector<128x32xf32> to vector<32x32xf32>
    %9 = vector.extract_strided_slice %6 {offsets = [64, 0], sizes = [64, 32], strides = [1, 1]} : vector<128x32xf32> to vector<64x32xf32>
    %cst_5 = arith.constant dense<0.000000e+00> : vector<32x256xf32>
    %10 = tpu.matmul %7, %4, %cst_5 {dimension_numbers = #tpu.dot_dimension_numbers<[1], [0], [0], [1], [0, 0, 1, 1], [], []>} : vector<32x32xf32>, vector<32x256xf32>, vector<32x256xf32> -> vector<32x256xf32>
    %cst_6 = arith.constant dense<0.000000e+00> : vector<32x256xf32>
    %11 = tpu.matmul %8, %5, %cst_6 {dimension_numbers = #tpu.dot_dimension_numbers<[1], [0], [0], [1], [0, 0, 1, 1], [], []>} : vector<32x32xf32>, vector<32x256xf32>, vector<32x256xf32> -> vector<32x256xf32>
    %12 = arith.addf %10, %11 : vector<32x256xf32>
    %c0_7 = arith.constant 0 : index
    %c0_8 = arith.constant 0 : index
    %13 = vector.load %arg5[%c0_7, %c0_8] : memref<160x1xf32, #tpu.memory_space<vmem>>, vector<160x1xf32>
    %14 = vector.extract_strided_slice %13 {offsets = [0, 0], sizes = [32, 1], strides = [1, 1]} : vector<160x1xf32> to vector<32x1xf32>
    %15 = vector.extract_strided_slice %13 {offsets = [32, 0], sizes = [32, 1], strides = [1, 1]} : vector<160x1xf32> to vector<32x1xf32>
    %16 = vector.extract_strided_slice %13 {offsets = [64, 0], sizes = [64, 1], strides = [1, 1]} : vector<160x1xf32> to vector<64x1xf32>
    %17 = vector.extract_strided_slice %13 {offsets = [128, 0], sizes = [32, 1], strides = [1, 1]} : vector<160x1xf32> to vector<32x1xf32>
    %cst_9 = arith.constant dense<0.000000e+00> : vector<32xf32>
    %18 = vector.multi_reduction <add>, %12, %cst_9 [1] : vector<32x256xf32> to vector<32xf32>
    %19 = vector.shape_cast %18 : vector<32xf32> to vector<32x1xf32>
    %20 = vector.extract_strided_slice %19 {offsets = [0, 0], sizes = [16, 1], strides = [1, 1]} : vector<32x1xf32> to vector<16x1xf32>
    %21 = vector.extract_strided_slice %19 {offsets = [16, 0], sizes = [16, 1], strides = [1, 1]} : vector<32x1xf32> to vector<16x1xf32>
    %22 = arith.addf %20, %21 : vector<16x1xf32>
    %cst_10 = arith.constant 0.001953125 : f32
    %23 = vector.broadcast %cst_10 : f32 to vector<16x1xf32>
    %24 = arith.mulf %22, %23 : vector<16x1xf32>
    %25 = tpu.concatenate %24, %24 in 0 : vector<16x1xf32>, vector<16x1xf32> -> vector<32x1xf32>
    %26 = vector.broadcast %25 : vector<32x1xf32> to vector<32x256xf32>
    %27 = arith.subf %12, %26 : vector<32x256xf32>
    %28 = arith.mulf %27, %27 : vector<32x256xf32>
    %cst_11 = arith.constant dense<0.000000e+00> : vector<32xf32>
    %29 = vector.multi_reduction <add>, %28, %cst_11 [1] : vector<32x256xf32> to vector<32xf32>
    %30 = vector.shape_cast %29 : vector<32xf32> to vector<32x1xf32>
    %31 = vector.extract_strided_slice %30 {offsets = [0, 0], sizes = [16, 1], strides = [1, 1]} : vector<32x1xf32> to vector<16x1xf32>
    %32 = vector.extract_strided_slice %30 {offsets = [16, 0], sizes = [16, 1], strides = [1, 1]} : vector<32x1xf32> to vector<16x1xf32>
    %33 = arith.addf %31, %32 : vector<16x1xf32>
    %cst_12 = arith.constant 0.001953125 : f32
    %34 = vector.broadcast %cst_12 : f32 to vector<16x1xf32>
    %35 = arith.mulf %33, %34 : vector<16x1xf32>
    %36 = tpu.concatenate %35, %35 in 0 : vector<16x1xf32>, vector<16x1xf32> -> vector<32x1xf32>
    %cst_13 = arith.constant 9.99999974E-6 : f32
    %37 = vector.broadcast %cst_13 : f32 to vector<32x1xf32>
    %38 = arith.addf %36, %37 : vector<32x1xf32>
    %39 = math.rsqrt %38 : vector<32x1xf32>
    %40 = arith.mulf %14, %39 : vector<32x1xf32>
    %41 = vector.broadcast %40 : vector<32x1xf32> to vector<32x256xf32>
    %42 = arith.mulf %27, %41 : vector<32x256xf32>
    %43 = vector.broadcast %15 : vector<32x1xf32> to vector<32x256xf32>
    %44 = arith.addf %42, %43 : vector<32x256xf32>
    %cst_14 = arith.constant dense<0.000000e+00> : vector<64x256xf32>
    %45 = tpu.matmul %9, %44, %cst_14 {dimension_numbers = #tpu.dot_dimension_numbers<[1], [0], [0], [1], [0, 0, 1, 1], [], []>} : vector<64x32xf32>, vector<32x256xf32>, vector<64x256xf32> -> vector<64x256xf32>
    %46 = vector.broadcast %16 : vector<64x1xf32> to vector<64x256xf32>
    %47 = arith.addf %45, %46 : vector<64x256xf32>
    %cst_15 = arith.constant 5.000000e-01 : f32
    %48 = vector.broadcast %cst_15 : f32 to vector<64x256xf32>
    %49 = arith.mulf %48, %47 : vector<64x256xf32>
    %50 = arith.mulf %47, %47 : vector<64x256xf32>
    %51 = arith.mulf %50, %47 : vector<64x256xf32>
    %cst_16 = arith.constant 4.471500e-02 : f32
    %52 = vector.broadcast %cst_16 : f32 to vector<64x256xf32>
    %53 = arith.mulf %52, %51 : vector<64x256xf32>
    %54 = arith.addf %47, %53 : vector<64x256xf32>
    %cst_17 = arith.constant 0.797884583 : f32
    %55 = vector.broadcast %cst_17 : f32 to vector<64x256xf32>
    %56 = arith.mulf %55, %54 : vector<64x256xf32>
    %57 = math.tanh %56 : vector<64x256xf32>
    %cst_18 = arith.constant 1.000000e+00 : f32
    %58 = vector.broadcast %cst_18 : f32 to vector<64x256xf32>
    %59 = arith.addf %58, %57 : vector<64x256xf32>
    %60 = arith.mulf %49, %59 : vector<64x256xf32>
    %c0_19 = arith.constant 0 : index
    %c0_20 = arith.constant 0 : index
    %61 = vector.load %arg4[%c0_19, %c0_20] : memref<32x64xf32, #tpu.memory_space<vmem>>, vector<32x64xf32>
    %cst_21 = arith.constant dense<0.000000e+00> : vector<32x256xf32>
    %62 = tpu.matmul %61, %60, %cst_21 {dimension_numbers = #tpu.dot_dimension_numbers<[1], [0], [0], [1], [0, 0, 1, 1], [], []>} : vector<32x64xf32>, vector<64x256xf32>, vector<32x256xf32> -> vector<32x256xf32>
    %63 = vector.broadcast %17 : vector<32x1xf32> to vector<32x256xf32>
    %64 = arith.addf %62, %63 : vector<32x256xf32>
    %c0_22 = arith.constant 0 : index
    %c0_23 = arith.constant 0 : index
    %65 = vector.load %arg6[%c0_22, %c0_23] : memref<32x256xf32, #tpu.memory_space<vmem>>, vector<32x256xf32>
    tpu.vector_store %arg6[%c0_22, %c0_23], %64 {strides = array<i32>} : memref<32x256xf32, #tpu.memory_space<vmem>>, vector<32x256xf32>,
    return
  }
  func.func @transform_0(%arg0: i32) -> (i32, i32) {
    %c0_i32 = arith.constant 0 : i32
    %c0_i32_0 = arith.constant 0 : i32
    %c0_i32_1 = arith.constant 0 : i32
    return %c0_i32, %c0_i32_0 : i32, i32
  }
  func.func @transform_1(%arg0: i32) -> (i32, i32) {
    %c0_i32 = arith.constant 0 : i32
    %c0_i32_0 = arith.constant 0 : i32
    %c0_i32_1 = arith.constant 0 : i32
    return %c0_i32, %c0_i32_0 : i32, i32
  }
  func.func @transform_2(%arg0: i32) -> (i32, i32) {
    %c0_i32 = arith.constant 0 : i32
    %c0_i32_0 = arith.constant 0 : i32
    %c0_i32_1 = arith.constant 0 : i32
    return %c0_i32, %c0_i32_0 : i32, i32
  }
  func.func @transform_3(%arg0: i32) -> (i32, i32) {
    %c0_i32 = arith.constant 0 : i32
    %c0_i32_0 = arith.constant 0 : i32
    %c0_i32_1 = arith.constant 0 : i32
    return %c0_i32, %c0_i32_0 : i32, i32
  }
  func.func @transform_4(%arg0: i32) -> (i32, i32) {
    %c0_i32 = arith.constant 0 : i32
    %c0_i32_0 = arith.constant 0 : i32
    %c0_i32_1 = arith.constant 0 : i32
    return %c0_i32, %c0_i32_0 : i32, i32
  }
  func.func @transform_5(%arg0: i32) -> (i32, i32) {
    %c0_i32 = arith.constant 0 : i32
    %c0_i32_0 = arith.constant 0 : i32
    %c0_i32_1 = arith.constant 0 : i32
    return %c0_i32, %c0_i32_0 : i32, i32
  }
}

</mosaic_0001>

<llo_original>
// kernel: fourier_block.1
$region0: #{fourier_block.1}
  #allocation0 [shape = 'u32[]', space=smem, size = 0x4, offset = 0x4, fixed_abs, tag = 'smem constant byte address 0x4 - core index']
  #allocation1 [shape = 'u32[144,128]{1,0:T(1,128)}', space=vmem, size = 0x12000, scoped, tag = 'internal scratch']
  %s0 = inlined_call_operand.vmem [shape: f32[32,256], index: 0, kind: input, shape index: {}]
  %s1 = inlined_call_operand.vmem [shape: bf16[256,512], index: 1, kind: input, shape index: {}]
  %s2 = inlined_call_operand.vmem [shape: f32[128,32], index: 2, kind: input, shape index: {}]
  %s3 = inlined_call_operand.vmem [shape: f32[32,64], index: 3, kind: input, shape index: {}]
  %s4 = inlined_call_operand.vmem [shape: f32[160,1], index: 4, kind: input, shape index: {}]
  %s5 = inlined_call_operand.vmem [shape: f32[32,256], index: 5, kind: output, shape index: {}]
  %s6 = sld [smem:[#allocation0]]
  $region30: #{fourier_block.1} parent=0
    _
  %s8 = ssub.s32 1, %s6
  %s9 = scalar_select 0, %s8, %s6
  // Predicated region
  $region2: #{fourier_block.1} parent=0 // pred_check
    _
  $region3: #{fourier_block.1} parent=0 // pred_check_branch
    %11 = sbr.rel (0) target = $region5
  $region4: #{fourier_block.1} parent=0 // pred_region
    _
  $region5: #{fourier_block.1} parent=0 // pred_fallthru
    _
  // Predicated region
  $region6: #{fourier_block.1} parent=0 // pred_check
    _
  $region7: #{fourier_block.1} parent=0 // pred_check_branch
    %13 = sbr.rel (0) target = $region9
  $region8: #{fourier_block.1} parent=0 // pred_region
    _
  $region9: #{fourier_block.1} parent=0 // pred_fallthru
    _
  // Predicated region
  $region10: #{fourier_block.1} parent=0 // pred_check
    _
  $region11: #{fourier_block.1} parent=0 // pred_check_branch
    %15 = sbr.rel (0) target = $region13
  $region12: #{fourier_block.1} parent=0 // pred_region
    _
  $region13: #{fourier_block.1} parent=0 // pred_fallthru
    _
  // Predicated region
  $region14: #{fourier_block.1} parent=0 // pred_check
    _
  $region15: #{fourier_block.1} parent=0 // pred_check_branch
    %17 = sbr.rel (0) target = $region17
  $region16: #{fourier_block.1} parent=0 // pred_region
    _
  $region17: #{fourier_block.1} parent=0 // pred_fallthru
    _
  // Predicated region
  $region18: #{fourier_block.1} parent=0 // pred_check
    _
  $region19: #{fourier_block.1} parent=0 // pred_check_branch
    %19 = sbr.rel (0) target = $region21
  $region20: #{fourier_block.1} parent=0 // pred_region
    _
  $region21: #{fourier_block.1} parent=0 // pred_fallthru
    _
  %v20 = vld [vmem:[%s0] sm:$0xff]
  %v21 = vld [vmem:[%s0 + $0x8] sm:$0xff]
  %v22 = vld [vmem:[%s0 + $0x10] sm:$0xff]
  %v23 = vld [vmem:[%s0 + $0x18] sm:$0xff]
  %v24 = vld [vmem:[%s0 + $0x20] sm:$0xff]
  %v25 = vld [vmem:[%s0 + $0x28] sm:$0xff]
  %v26 = vld [vmem:[%s0 + $0x30] sm:$0xff]
  %v27 = vld [vmem:[%s0 + $0x38] sm:$0xff]
  %v28 = vld [vmem:[%s1] sm:$0xff]
  %v29 = vld [vmem:[%s1 + $0x8] sm:$0xff]
  %v30 = vld [vmem:[%s1 + $0x10] sm:$0xff]
  %v31 = vld [vmem:[%s1 + $0x18] sm:$0xff]
  %v32 = vld [vmem:[%s1 + $0x20] sm:$0xff]
  %v33 = vld [vmem:[%s1 + $0x28] sm:$0xff]
  %v34 = vld [vmem:[%s1 + $0x30] sm:$0xff]
  %v35 = vld [vmem:[%s1 + $0x38] sm:$0xff]
  %v36 = vld [vmem:[%s1 + $0x40] sm:$0xff]
  %v37 = vld [vmem:[%s1 + $0x48] sm:$0xff]
  %v38 = vld [vmem:[%s1 + $0x50] sm:$0xff]
  %v39 = vld [vmem:[%s1 + $0x58] sm:$0xff]
  %v40 = vld [vmem:[%s1 + $0x60] sm:$0xff]
  %v41 = vld [vmem:[%s1 + $0x68] sm:$0xff]
  %v42 = vld [vmem:[%s1 + $0x70] sm:$0xff]
  %v43 = vld [vmem:[%s1 + $0x78] sm:$0xff]
  %v44 = vld [vmem:[%s1 + $0x80] sm:$0xff]
  %v45 = vld [vmem:[%s1 + $0x88] sm:$0xff]
  %v46 = vld [vmem:[%s1 + $0x90] sm:$0xff]
  %v47 = vld [vmem:[%s1 + $0x98] sm:$0xff]
  %v48 = vld [vmem:[%s1 + $0xa0] sm:$0xff]
  %v49 = vld [vmem:[%s1 + $0xa8] sm:$0xff]
  %v50 = vld [vmem:[%s1 + $0xb0] sm:$0xff]
  %v51 = vld [vmem:[%s1 + $0xb8] sm:$0xff]
  %v52 = vld [vmem:[%s1 + $0xc0] sm:$0xff]
  %v53 = vld [vmem:[%s1 + $0xc8] sm:$0xff]
  %v54 = vld [vmem:[%s1 + $0xd0] sm:$0xff]
  %v55 = vld [vmem:[%s1 + $0xd8] sm:$0xff]
  %v56 = vld [vmem:[%s1 + $0xe0] sm:$0xff]
  %v57 = vld [vmem:[%s1 + $0xe8] sm:$0xff]
  %v58 = vld [vmem:[%s1 + $0xf0] sm:$0xff]
  %v59 = vld [vmem:[%s1 + $0xf8] sm:$0xff]
  %v60 = vld [vmem:[%s1 + $0x100] sm:$0xff]
  %v61 = vld [vmem:[%s1 + $0x108] sm:$0xff]
  %v62 = vld [vmem:[%s1 + $0x110] sm:$0xff]
  %v63 = vld [vmem:[%s1 + $0x118] sm:$0xff]
  %v64 = vld [vmem:[%s1 + $0x120] sm:$0xff]
  %v65 = vld [vmem:[%s1 + $0x128] sm:$0xff]
  %v66 = vld [vmem:[%s1 + $0x130] sm:$0xff]
  %v67 = vld [vmem:[%s1 + $0x138] sm:$0xff]
  %v68 = vld [vmem:[%s1 + $0x140] sm:$0xff]
  %v69 = vld [vmem:[%s1 + $0x148] sm:$0xff]
  %v70 = vld [vmem:[%s1 + $0x150] sm:$0xff]
  %v71 = vld [vmem:[%s1 + $0x158] sm:$0xff]
  %v72 = vld [vmem:[%s1 + $0x160] sm:$0xff]
  %v73 = vld [vmem:[%s1 + $0x168] sm:$0xff]
  %v74 = vld [vmem:[%s1 + $0x170] sm:$0xff]
  %v75 = vld [vmem:[%s1 + $0x178] sm:$0xff]
  %v76 = vld [vmem:[%s1 + $0x180] sm:$0xff]
  %v77 = vld [vmem:[%s1 + $0x188] sm:$0xff]
  %v78 = vld [vmem:[%s1 + $0x190] sm:$0xff]
  %v79 = vld [vmem:[%s1 + $0x198] sm:$0xff]
  %v80 = vld [vmem:[%s1 + $0x1a0] sm:$0xff]
  %v81 = vld [vmem:[%s1 + $0x1a8] sm:$0xff]
  %v82 = vld [vmem:[%s1 + $0x1b0] sm:$0xff]
  %v83 = vld [vmem:[%s1 + $0x1b8] sm:$0xff]
  %v84 = vld [vmem:[%s1 + $0x1c0] sm:$0xff]
  %v85 = vld [vmem:[%s1 + $0x1c8] sm:$0xff]
  %v86 = vld [vmem:[%s1 + $0x1d0] sm:$0xff]
  %v87 = vld [vmem:[%s1 + $0x1d8] sm:$0xff]
  %v88 = vld [vmem:[%s1 + $0x1e0] sm:$0xff]
  %v89 = vld [vmem:[%s1 + $0x1e8] sm:$0xff]
  %v90 = vld [vmem:[%s1 + $0x1f0] sm:$0xff]
  %v91 = vld [vmem:[%s1 + $0x1f8] sm:$0xff]
  %v92 = vunpack.c.l.bf16 %v28
  %v93 = vunpack.c.h.bf16 %v28
  %v94 = vunpack.c.l.bf16 %v29
  %v95 = vunpack.c.h.bf16 %v29
  %v96 = vunpack.c.l.bf16 %v30
  %v97 = vunpack.c.h.bf16 %v30
  %v98 = vunpack.c.l.bf16 %v31
  %v99 = vunpack.c.h.bf16 %v31
  %v100 = vunpack.c.l.bf16 %v32
  %v101 = vunpack.c.h.bf16 %v32
  %v102 = vunpack.c.l.bf16 %v33
  %v103 = vunpack.c.h.bf16 %v33
  %v104 = vunpack.c.l.bf16 %v34
  %v105 = vunpack.c.h.bf16 %v34
  %v106 = vunpack.c.l.bf16 %v35
  %v107 = vunpack.c.h.bf16 %v35
  %v108 = vunpack.c.l.bf16 %v36
  %v109 = vunpack.c.h.bf16 %v36
  %v110 = vunpack.c.l.bf16 %v37
  %v111 = vunpack.c.h.bf16 %v37
  %v112 = vunpack.c.l.bf16 %v38
  %v113 = vunpack.c.h.bf16 %v38
  %v114 = vunpack.c.l.bf16 %v39
  %v115 = vunpack.c.h.bf16 %v39
  %v116 = vunpack.c.l.bf16 %v40
  %v117 = vunpack.c.h.bf16 %v40
  %v118 = vunpack.c.l.bf16 %v41
  %v119 = vunpack.c.h.bf16 %v41
  %v120 = vunpack.c.l.bf16 %v42
  %v121 = vunpack.c.h.bf16 %v42
  %v122 = vunpack.c.l.bf16 %v43
  %v123 = vunpack.c.h.bf16 %v43
  %v124 = vunpack.c.l.bf16 %v44
  %v125 = vunpack.c.h.bf16 %v44
  %v126 = vunpack.c.l.bf16 %v45
  %v127 = vunpack.c.h.bf16 %v45
  %v128 = vunpack.c.l.bf16 %v46
  %v129 = vunpack.c.h.bf16 %v46
  %v130 = vunpack.c.l.bf16 %v47
  %v131 = vunpack.c.h.bf16 %v47
  %v132 = vunpack.c.l.bf16 %v48
  %v133 = vunpack.c.h.bf16 %v48
  %v134 = vunpack.c.l.bf16 %v49
  %v135 = vunpack.c.h.bf16 %v49
  %v136 = vunpack.c.l.bf16 %v50
  %v137 = vunpack.c.h.bf16 %v50
  %v138 = vunpack.c.l.bf16 %v51
  %v139 = vunpack.c.h.bf16 %v51
  %v140 = vunpack.c.l.bf16 %v52
  %v141 = vunpack.c.h.bf16 %v52
  %v142 = vunpack.c.l.bf16 %v53
  %v143 = vunpack.c.h.bf16 %v53
  %v144 = vunpack.c.l.bf16 %v54
  %v145 = vunpack.c.h.bf16 %v54
  %v146 = vunpack.c.l.bf16 %v55
  %v147 = vunpack.c.h.bf16 %v55
  %v148 = vunpack.c.l.bf16 %v56
  %v149 = vunpack.c.h.bf16 %v56
  %v150 = vunpack.c.l.bf16 %v57
  %v151 = vunpack.c.h.bf16 %v57
  %v152 = vunpack.c.l.bf16 %v58
  %v153 = vunpack.c.h.bf16 %v58
  %v154 = vunpack.c.l.bf16 %v59
  %v155 = vunpack.c.h.bf16 %v59
  %v156 = vunpack.c.l.bf16 %v60
  %v157 = vunpack.c.h.bf16 %v60
  %v158 = vunpack.c.l.bf16 %v61
  %v159 = vunpack.c.h.bf16 %v61
  %v160 = vunpack.c.l.bf16 %v62
  %v161 = vunpack.c.h.bf16 %v62
  %v162 = vunpack.c.l.bf16 %v63
  %v163 = vunpack.c.h.bf16 %v63
  %v164 = vunpack.c.l.bf16 %v64
  %v165 = vunpack.c.h.bf16 %v64
  %v166 = vunpack.c.l.bf16 %v65
  %v167 = vunpack.c.h.bf16 %v65
  %v168 = vunpack.c.l.bf16 %v66
  %v169 = vunpack.c.h.bf16 %v66
  %v170 = vunpack.c.l.bf16 %v67
  %v171 = vunpack.c.h.bf16 %v67
  %v172 = vunpack.c.l.bf16 %v68
  %v173 = vunpack.c.h.bf16 %v68
  %v174 = vunpack.c.l.bf16 %v69
  %v175 = vunpack.c.h.bf16 %v69
  %v176 = vunpack.c.l.bf16 %v70
  %v177 = vunpack.c.h.bf16 %v70
  %v178 = vunpack.c.l.bf16 %v71
  %v179 = vunpack.c.h.bf16 %v71
  %v180 = vunpack.c.l.bf16 %v72
  %v181 = vunpack.c.h.bf16 %v72
  %v182 = vunpack.c.l.bf16 %v73
  %v183 = vunpack.c.h.bf16 %v73
  %v184 = vunpack.c.l.bf16 %v74
  %v185 = vunpack.c.h.bf16 %v74
  %v186 = vunpack.c.l.bf16 %v75
  %v187 = vunpack.c.h.bf16 %v75
  %v188 = vunpack.c.l.bf16 %v76
  %v189 = vunpack.c.h.bf16 %v76
  %v190 = vunpack.c.l.bf16 %v77
  %v191 = vunpack.c.h.bf16 %v77
  %v192 = vunpack.c.l.bf16 %v78
  %v193 = vunpack.c.h.bf16 %v78
  %v194 = vunpack.c.l.bf16 %v79
  %v195 = vunpack.c.h.bf16 %v79
  %v196 = vunpack.c.l.bf16 %v80
  %v197 = vunpack.c.h.bf16 %v80
  %v198 = vunpack.c.l.bf16 %v81
  %v199 = vunpack.c.h.bf16 %v81
  %v200 = vunpack.c.l.bf16 %v82
  %v201 = vunpack.c.h.bf16 %v82
  %v202 = vunpack.c.l.bf16 %v83
  %v203 = vunpack.c.h.bf16 %v83
  %v204 = vunpack.c.l.bf16 %v84
  %v205 = vunpack.c.h.bf16 %v84
  %v206 = vunpack.c.l.bf16 %v85
  %v207 = vunpack.c.h.bf16 %v85
  %v208 = vunpack.c.l.bf16 %v86
  %v209 = vunpack.c.h.bf16 %v86
  %v210 = vunpack.c.l.bf16 %v87
  %v211 = vunpack.c.h.bf16 %v87
  %v212 = vunpack.c.l.bf16 %v88
  %v213 = vunpack.c.h.bf16 %v88
  %v214 = vunpack.c.l.bf16 %v89
  %v215 = vunpack.c.h.bf16 %v89
  %v216 = vunpack.c.l.bf16 %v90
  %v217 = vunpack.c.h.bf16 %v90
  %v218 = vunpack.c.l.bf16 %v91
  %v219 = vunpack.c.h.bf16 %v91
  %220 = vmatprep.subr.mxu0 %v93
  %221 = vmatpush1.msra.mxu0 %v92
  %222 = vmatprep.subr.mxu0 %v97
  %223 = vmatpush1.msra.mxu0 %v96
  %224 = vmatprep.subr.mxu0 %v101
  %225 = vmatpush1.msra.mxu0 %v100
  %226 = vmatprep.subr.mxu0 %v105
  %227 = vmatpush1.msra.mxu0 %v104
  %228 = vmatprep.subr.mxu0 %v109
  %229 = vmatpush1.msra.mxu0 %v108
  %230 = vmatprep.subr.mxu0 %v113
  %231 = vmatpush1.msra.mxu0 %v112
  %232 = vmatprep.subr.mxu0 %v117
  %233 = vmatpush1.msra.mxu0 %v116
  %234 = vmatprep.subr.mxu0 %v121
  %235 = vmatpush1.msra.mxu0 %v120
  %236 = vmatprep.subr.mxu0 %v125
  %237 = vmatpush1.msra.mxu0 %v124
  %238 = vmatprep.subr.mxu0 %v129
  %239 = vmatpush1.msra.mxu0 %v128
  %240 = vmatprep.subr.mxu0 %v133
  %241 = vmatpush1.msra.mxu0 %v132
  %242 = vmatprep.subr.mxu0 %v137
  %243 = vmatpush1.msra.mxu0 %v136
  %244 = vmatprep.subr.mxu0 %v141
  %245 = vmatpush1.msra.mxu0 %v140
  %246 = vmatprep.subr.mxu0 %v145
  %247 = vmatpush1.msra.mxu0 %v144
  %248 = vmatprep.subr.mxu0 %v149
  %249 = vmatpush1.msra.mxu0 %v148
  %250 = vmatprep.subr.mxu0 %v153
  %251 = vmatpush1.msra.mxu0 %v152
  %252 = vmatprep.subr.mxu0 %v157
  %253 = vmatpush1.msra.mxu0 %v156
  %254 = vmatprep.subr.mxu0 %v161
  %255 = vmatpush1.msra.mxu0 %v160
  %256 = vmatprep.subr.mxu0 %v165
  %257 = vmatpush1.msra.mxu0 %v164
  %258 = vmatprep.subr.mxu0 %v169
  %259 = vmatpush1.msra.mxu0 %v168
  %260 = vmatprep.subr.mxu0 %v173
  %261 = vmatpush1.msra.mxu0 %v172
  %262 = vmatprep.subr.mxu0 %v177
  %263 = vmatpush1.msra.mxu0 %v176
  %264 = vmatprep.subr.mxu0 %v181
  %265 = vmatpush1.msra.mxu0 %v180
  %266 = vmatprep.subr.mxu0 %v185
  %267 = vmatpush1.msra.mxu0 %v184
  %268 = vmatprep.subr.mxu0 %v189
  %269 = vmatpush1.msra.mxu0 %v188
  %270 = vmatprep.subr.mxu0 %v193
  %271 = vmatpush1.msra.mxu0 %v192
  %272 = vmatprep.subr.mxu0 %v197
  %273 = vmatpush1.msra.mxu0 %v196
  %274 = vmatprep.subr.mxu0 %v201
  %275 = vmatpush1.msra.mxu0 %v200
  %276 = vmatprep.subr.mxu0 %v205
  %277 = vmatpush1.msra.mxu0 %v204
  %278 = vmatprep.subr.mxu0 %v209
  %279 = vmatpush1.msra.mxu0 %v208
  %280 = vmatprep.subr.mxu0 %v213
  %281 = vmatpush1.msra.mxu0 %v212
  %282 = vmatprep.subr.mxu0 %v217
  %283 = vmatpush1.msra.mxu0 %v216
  %284 = vmatprep.mubr.f32.mxu0 %v21
  %285 = vmatmul.mubr.f32.gmra.mrb[0].mxu0 %v20
  %v286 = vpop.f32.mrb[0].mxu0
  %v287 = vadd.f32 0.0, %v286
  %v288 = vpop.f32.mrb[0].mxu0
  %v289 = vadd.f32 0.0, %v288
  %290 = vmatprep.mubr.f32.mxu0 %v23
  %291 = vmatmul.mubr.f32.gmra.mrb[0].mxu0 %v22
  %v292 = vpop.f32.mrb[0].mxu0
  %v293 = vadd.f32 0.0, %v292
  %v294 = vpop.f32.mrb[0].mxu0
  %v295 = vadd.f32 0.0, %v294
  %296 = vmatprep.mubr.f32.mxu0 %v25
  %297 = vmatmul.mubr.f32.gmra.mrb[0].mxu0 %v24
  %v298 = vpop.f32.mrb[0].mxu0
  %v299 = vadd.f32 0.0, %v298
  %v300 = vpop.f32.mrb[0].mxu0
  %v301 = vadd.f32 0.0, %v300
  %302 = vmatprep.mubr.f32.mxu0 %v27
  %303 = vmatmul.mubr.f32.gmra.mrb[0].mxu0 %v26
  %v304 = vpop.f32.mrb[0].mxu0
  %v305 = vadd.f32 0.0, %v304
  %v306 = vpop.f32.mrb[0].mxu0
  %v307 = vadd.f32 0.0, %v306
  %308 = vdwg.mxu0
  %309 = vmatprep.subr.mxu0 %v95
  %310 = vmatpush1.msra.mxu0 %v94
  %311 = vmatprep.subr.mxu0 %v99
  %312 = vmatpush1.msra.mxu0 %v98
  %313 = vmatprep.subr.mxu0 %v103
  %314 = vmatpush1.msra.mxu0 %v102
  %315 = vmatprep.subr.mxu0 %v107
  %316 = vmatpush1.msra.mxu0 %v106
  %317 = vmatprep.subr.mxu0 %v111
  %318 = vmatpush1.msra.mxu0 %v110
  %319 = vmatprep.subr.mxu0 %v115
  %320 = vmatpush1.msra.mxu0 %v114
  %321 = vmatprep.subr.mxu0 %v119
  %322 = vmatpush1.msra.mxu0 %v118
  %323 = vmatprep.subr.mxu0 %v123
  %324 = vmatpush1.msra.mxu0 %v122
  %325 = vmatprep.subr.mxu0 %v127
  %326 = vmatpush1.msra.mxu0 %v126
  %327 = vmatprep.subr.mxu0 %v131
  %328 = vmatpush1.msra.mxu0 %v130
  %329 = vmatprep.subr.mxu0 %v135
  %330 = vmatpush1.msra.mxu0 %v134
  %331 = vmatprep.subr.mxu0 %v139
  %332 = vmatpush1.msra.mxu0 %v138
  %333 = vmatprep.subr.mxu0 %v143
  %334 = vmatpush1.msra.mxu0 %v142
  %335 = vmatprep.subr.mxu0 %v147
  %336 = vmatpush1.msra.mxu0 %v146
  %337 = vmatprep.subr.mxu0 %v151
  %338 = vmatpush1.msra.mxu0 %v150
  %339 = vmatprep.subr.mxu0 %v155
  %340 = vmatpush1.msra.mxu0 %v154
  %341 = vmatprep.subr.mxu0 %v159
  %342 = vmatpush1.msra.mxu0 %v158
  %343 = vmatprep.subr.mxu0 %v163
  %344 = vmatpush1.msra.mxu0 %v162
  %345 = vmatprep.subr.mxu0 %v167
  %346 = vmatpush1.msra.mxu0 %v166
  %347 = vmatprep.subr.mxu0 %v171
  %348 = vmatpush1.msra.mxu0 %v170
  %349 = vmatprep.subr.mxu0 %v175
  %350 = vmatpush1.msra.mxu0 %v174
  %351 = vmatprep.subr.mxu0 %v179
  %352 = vmatpush1.msra.mxu0 %v178
  %353 = vmatprep.subr.mxu0 %v183
  %354 = vmatpush1.msra.mxu0 %v182
  %355 = vmatprep.subr.mxu0 %v187
  %356 = vmatpush1.msra.mxu0 %v186
  %357 = vmatprep.subr.mxu0 %v191
  %358 = vmatpush1.msra.mxu0 %v190
  %359 = vmatprep.subr.mxu0 %v195
  %360 = vmatpush1.msra.mxu0 %v194
  %361 = vmatprep.subr.mxu0 %v199
  %362 = vmatpush1.msra.mxu0 %v198
  %363 = vmatprep.subr.mxu0 %v203
  %364 = vmatpush1.msra.mxu0 %v202
  %365 = vmatprep.subr.mxu0 %v207
  %366 = vmatpush1.msra.mxu0 %v206
  %367 = vmatprep.subr.mxu0 %v211
  %368 = vmatpush1.msra.mxu0 %v210
  %369 = vmatprep.subr.mxu0 %v215
  %370 = vmatpush1.msra.mxu0 %v214
  %371 = vmatprep.subr.mxu0 %v219
  %372 = vmatpush1.msra.mxu0 %v218
  %373 = vmatprep.mubr.f32.mxu0 %v21
  %374 = vmatmul.mubr.f32.gmra.mrb[0].mxu0 %v20
  %v375 = vpop.f32.mrb[0].mxu0
  %v376 = vadd.f32 0.0, %v375
  %v377 = vpop.f32.mrb[0].mxu0
  %v378 = vadd.f32 0.0, %v377
  %379 = vmatprep.mubr.f32.mxu0 %v23
  %380 = vmatmul.mubr.f32.gmra.mrb[0].mxu0 %v22
  %v381 = vpop.f32.mrb[0].mxu0
  %v382 = vadd.f32 0.0, %v381
  %v383 = vpop.f32.mrb[0].mxu0
  %v384 = vadd.f32 0.0, %v383
  %385 = vmatprep.mubr.f32.mxu0 %v25
  %386 = vmatmul.mubr.f32.gmra.mrb[0].mxu0 %v24
  %v387 = vpop.f32.mrb[0].mxu0
  %v388 = vadd.f32 0.0, %v387
  %v389 = vpop.f32.mrb[0].mxu0
  %v390 = vadd.f32 0.0, %v389
  %391 = vmatprep.mubr.f32.mxu0 %v27
  %392 = vmatmul.mubr.f32.gmra.mrb[0].mxu0 %v26
  %v393 = vpop.f32.mrb[0].mxu0
  %v394 = vadd.f32 0.0, %v393
  %v395 = vpop.f32.mrb[0].mxu0
  %v396 = vadd.f32 0.0, %v395
  %397 = vdwg.mxu0
  %v398 = vld [vmem:[%s2] sm:$0xff]
  %v399 = vld [vmem:[%s2 + $0x8] sm:$0xff]
  %v400 = vld [vmem:[%s2 + $0x10] sm:$0xff]
  %v401 = vld [vmem:[%s2 + $0x18] sm:$0xff]
  %v402 = vld [vmem:[%s2 + $0x20] sm:$0xff]
  %v403 = vld [vmem:[%s2 + $0x28] sm:$0xff]
  %v404 = vld [vmem:[%s2 + $0x30] sm:$0xff]
  %v405 = vld [vmem:[%s2 + $0x38] sm:$0xff]
  %v406 = vld [vmem:[%s2 + $0x40] sm:$0xff]
  %v407 = vld [vmem:[%s2 + $0x48] sm:$0xff]
  %v408 = vld [vmem:[%s2 + $0x50] sm:$0xff]
  %v409 = vld [vmem:[%s2 + $0x58] sm:$0xff]
  %v410 = vld [vmem:[%s2 + $0x60] sm:$0xff]
  %v411 = vld [vmem:[%s2 + $0x68] sm:$0xff]
  %v412 = vld [vmem:[%s2 + $0x70] sm:$0xff]
  %v413 = vld [vmem:[%s2 + $0x78] sm:$0xff]
  %vm414 = vcmask 261120
  %v416 = vsel %vm414, %v402, 0
  %v419 = vsel %vm414, %v403, 0
  %v422 = vsel %vm414, %v404, 0
  %v425 = vsel %vm414, %v405, 0
  %427 = vmatprep.subr.mxu0 %v378
  %428 = vmatpush1.msra.mxu0 %v376
  %429 = vmatprep.subr.mxu0 %v384
  %430 = vmatpush1.msra.mxu0 %v382
  %431 = vmatprep.subr.mxu0 %v390
  %432 = vmatpush1.msra.mxu0 %v388
  %433 = vmatprep.subr.mxu0 %v396
  %434 = vmatpush1.msra.mxu0 %v394
  %435 = vmatprep.subr.mxu0 0.0
  %436 = vmatpush1.msra.mxu0 0.0
  %437 = vmatprep.subr.mxu0 0.0
  %438 = vmatpush1.msra.mxu0 0.0
  %439 = vmatprep.subr.mxu0 0.0
  %440 = vmatpush1.msra.mxu0 0.0
  %441 = vmatprep.subr.mxu0 0.0
  %442 = vmatpush1.msra.mxu0 0.0
  %443 = vmatprep.subr.mxu0 0.0
  %444 = vmatpush1.msra.mxu0 0.0
  %445 = vmatprep.subr.mxu0 0.0
  %446 = vmatpush1.msra.mxu0 0.0
  %447 = vmatprep.subr.mxu0 0.0
  %448 = vmatpush1.msra.mxu0 0.0
  %449 = vmatprep.subr.mxu0 0.0
  %450 = vmatpush1.msra.mxu0 0.0
  %451 = vmatprep.subr.mxu0 0.0
  %452 = vmatpush1.msra.mxu0 0.0
  %453 = vmatprep.subr.mxu0 0.0
  %454 = vmatpush1.msra.mxu0 0.0
  %455 = vmatprep.subr.mxu0 0.0
  %456 = vmatpush1.msra.mxu0 0.0
  %457 = vmatprep.subr.mxu0 0.0
  %458 = vmatpush1.msra.mxu0 0.0
  %459 = vmatprep.subr.mxu0 0.0
  %460 = vmatpush1.msra.mxu0 0.0
  %461 = vmatprep.subr.mxu0 0.0
  %462 = vmatpush1.msra.mxu0 0.0
  %463 = vmatprep.subr.mxu0 0.0
  %464 = vmatpush1.msra.mxu0 0.0
  %465 = vmatprep.subr.mxu0 0.0
  %466 = vmatpush1.msra.mxu0 0.0
  %467 = vmatprep.subr.mxu0 0.0
  %468 = vmatpush1.msra.mxu0 0.0
  %469 = vmatprep.subr.mxu0 0.0
  %470 = vmatpush1.msra.mxu0 0.0
  %471 = vmatprep.subr.mxu0 0.0
  %472 = vmatpush1.msra.mxu0 0.0
  %473 = vmatprep.subr.mxu0 0.0
  %474 = vmatpush1.msra.mxu0 0.0
  %475 = vmatprep.subr.mxu0 0.0
  %476 = vmatpush1.msra.mxu0 0.0
  %477 = vmatprep.subr.mxu0 0.0
  %478 = vmatpush1.msra.mxu0 0.0
  %479 = vmatprep.subr.mxu0 0.0
  %480 = vmatpush1.msra.mxu0 0.0
  %481 = vmatprep.subr.mxu0 0.0
  %482 = vmatpush1.msra.mxu0 0.0
  %483 = vmatprep.subr.mxu0 0.0
  %484 = vmatpush1.msra.mxu0 0.0
  %485 = vmatprep.subr.mxu0 0.0
  %486 = vmatpush1.msra.mxu0 0.0
  %487 = vmatprep.subr.mxu0 0.0
  %488 = vmatpush1.msra.mxu0 0.0
  %489 = vmatprep.subr.mxu0 0.0
  %490 = vmatpush1.msra.mxu0 0.0
  %491 = vmatprep.mubr.f32.mxu0 0.0
  %492 = vmatmul.mubr.f32.gmra.mrb[0].mxu0 %v416
  %v493 = vpop.f32.mrb[0].mxu0
  %v494 = vadd.f32 0.0, %v493
  %v495 = vpop.f32.mrb[0].mxu0
  %v496 = vadd.f32 0.0, %v495
  %497 = vmatprep.mubr.f32.mxu0 0.0
  %498 = vmatmul.mubr.f32.gmra.mrb[0].mxu0 %v419
  %v499 = vpop.f32.mrb[0].mxu0
  %v500 = vadd.f32 0.0, %v499
  %v501 = vpop.f32.mrb[0].mxu0
  %v502 = vadd.f32 0.0, %v501
  %503 = vmatprep.mubr.f32.mxu0 0.0
  %504 = vmatmul.mubr.f32.gmra.mrb[0].mxu0 %v422
  %v505 = vpop.f32.mrb[0].mxu0
  %v506 = vadd.f32 0.0, %v505
  %v507 = vpop.f32.mrb[0].mxu0
  %v508 = vadd.f32 0.0, %v507
  %509 = vmatprep.mubr.f32.mxu0 0.0
  %510 = vmatmul.mubr.f32.gmra.mrb[0].mxu0 %v425
  %v511 = vpop.f32.mrb[0].mxu0
  %v512 = vadd.f32 0.0, %v511
  %v513 = vpop.f32.mrb[0].mxu0
  %v514 = vadd.f32 0.0, %v513
  %515 = vdwg.mxu0
  %v517 = vsel %vm414, %v398, 0
  %v520 = vsel %vm414, %v399, 0
  %v523 = vsel %vm414, %v400, 0
  %v526 = vsel %vm414, %v401, 0
  %528 = vmatprep.subr.mxu0 %v289
  %529 = vmatpush1.msra.mxu0 %v287
  %530 = vmatprep.subr.mxu0 %v295
  %531 = vmatpush1.msra.mxu0 %v293
  %532 = vmatprep.subr.mxu0 %v301
  %533 = vmatpush1.msra.mxu0 %v299
  %534 = vmatprep.subr.mxu0 %v307
  %535 = vmatpush1.msra.mxu0 %v305
  %536 = vmatprep.subr.mxu0 0.0
  %537 = vmatpush1.msra.mxu0 0.0
  %538 = vmatprep.subr.mxu0 0.0
  %539 = vmatpush1.msra.mxu0 0.0
  %540 = vmatprep.subr.mxu0 0.0
  %541 = vmatpush1.msra.mxu0 0.0
  %542 = vmatprep.subr.mxu0 0.0
  %543 = vmatpush1.msra.mxu0 0.0
  %544 = vmatprep.subr.mxu0 0.0
  %545 = vmatpush1.msra.mxu0 0.0
  %546 = vmatprep.subr.mxu0 0.0
  %547 = vmatpush1.msra.mxu0 0.0
  %548 = vmatprep.subr.mxu0 0.0
  %549 = vmatpush1.msra.mxu0 0.0
  %550 = vmatprep.subr.mxu0 0.0
  %551 = vmatpush1.msra.mxu0 0.0
  %552 = vmatprep.subr.mxu0 0.0
  %553 = vmatpush1.msra.mxu0 0.0
  %554 = vmatprep.subr.mxu0 0.0
  %555 = vmatpush1.msra.mxu0 0.0
  %556 = vmatprep.subr.mxu0 0.0
  %557 = vmatpush1.msra.mxu0 0.0
  %558 = vmatprep.subr.mxu0 0.0
  %559 = vmatpush1.msra.mxu0 0.0
  %560 = vmatprep.subr.mxu0 0.0
  %561 = vmatpush1.msra.mxu0 0.0
  %562 = vmatprep.subr.mxu0 0.0
  %563 = vmatpush1.msra.mxu0 0.0
  %564 = vmatprep.subr.mxu0 0.0
  %565 = vmatpush1.msra.mxu0 0.0
  %566 = vmatprep.subr.mxu0 0.0
  %567 = vmatpush1.msra.mxu0 0.0
  %568 = vmatprep.subr.mxu0 0.0
  %569 = vmatpush1.msra.mxu0 0.0
  %570 = vmatprep.subr.mxu0 0.0
  %571 = vmatpush1.msra.mxu0 0.0
  %572 = vmatprep.subr.mxu0 0.0
  %573 = vmatpush1.msra.mxu0 0.0
  %574 = vmatprep.subr.mxu0 0.0
  %575 = vmatpush1.msra.mxu0 0.0
  %576 = vmatprep.subr.mxu0 0.0
  %577 = vmatpush1.msra.mxu0 0.0
  %578 = vmatprep.subr.mxu0 0.0
  %579 = vmatpush1.msra.mxu0 0.0
  %580 = vmatprep.subr.mxu0 0.0
  %581 = vmatpush1.msra.mxu0 0.0
  %582 = vmatprep.subr.mxu0 0.0
  %583 = vmatpush1.msra.mxu0 0.0
  %584 = vmatprep.subr.mxu0 0.0
  %585 = vmatpush1.msra.mxu0 0.0
  %586 = vmatprep.subr.mxu0 0.0
  %587 = vmatpush1.msra.mxu0 0.0
  %588 = vmatprep.subr.mxu0 0.0
  %589 = vmatpush1.msra.mxu0 0.0
  %590 = vmatprep.subr.mxu0 0.0
  %591 = vmatpush1.msra.mxu0 0.0
  %592 = vmatprep.mubr.f32.mxu0 0.0
  %593 = vmatmul.mubr.f32.gmra.mrb[0].mxu0 %v517
  %v594 = vpop.f32.mrb[0].mxu0
  %v595 = vadd.f32 %v494, %v594
  %v596 = vpop.f32.mrb[0].mxu0
  %v597 = vadd.f32 %v496, %v596
  %598 = vmatprep.mubr.f32.mxu0 0.0
  %599 = vmatmul.mubr.f32.gmra.mrb[0].mxu0 %v520
  %v600 = vpop.f32.mrb[0].mxu0
  %v601 = vadd.f32 %v500, %v600
  %v602 = vpop.f32.mrb[0].mxu0
  %v603 = vadd.f32 %v502, %v602
  %604 = vmatprep.mubr.f32.mxu0 0.0
  %605 = vmatmul.mubr.f32.gmra.mrb[0].mxu0 %v523
  %v606 = vpop.f32.mrb[0].mxu0
  %v607 = vadd.f32 %v506, %v606
  %v608 = vpop.f32.mrb[0].mxu0
  %v609 = vadd.f32 %v508, %v608
  %610 = vmatprep.mubr.f32.mxu0 0.0
  %611 = vmatmul.mubr.f32.gmra.mrb[0].mxu0 %v526
  %v612 = vpop.f32.mrb[0].mxu0
  %v613 = vadd.f32 %v512, %v612
  %v614 = vpop.f32.mrb[0].mxu0
  %v615 = vadd.f32 %v514, %v614
  %616 = vdwg.mxu0
  %v617 = vld [vmem:[%s4] sm:$0xff]
  %v618 = vld [vmem:[%s4 + $0x8] sm:$0xff]
  %v619 = vld [vmem:[%s4 + $0x10] sm:$0xff]
  %v620 = vld [vmem:[%s4 + $0x18] sm:$0xff]
  %v621 = vld [vmem:[%s4 + $0x20] sm:$0xff]
  %v622 = vld [vmem:[%s4 + $0x28] sm:$0xff]
  %v623 = vld [vmem:[%s4 + $0x30] sm:$0xff]
  %v624 = vld [vmem:[%s4 + $0x38] sm:$0xff]
  %v625 = vld [vmem:[%s4 + $0x40] sm:$0xff]
  %v626 = vld [vmem:[%s4 + $0x48] sm:$0xff]
  %v627 = vld [vmem:[%s4 + $0x50] sm:$0xff]
  %v628 = vld [vmem:[%s4 + $0x58] sm:$0xff]
  %v629 = vld [vmem:[%s4 + $0x60] sm:$0xff]
  %v630 = vld [vmem:[%s4 + $0x68] sm:$0xff]
  %v631 = vld [vmem:[%s4 + $0x70] sm:$0xff]
  %v632 = vld [vmem:[%s4 + $0x78] sm:$0xff]
  %v633 = vld [vmem:[%s4 + $0x80] sm:$0xff]
  %v634 = vld [vmem:[%s4 + $0x88] sm:$0xff]
  %v635 = vld [vmem:[%s4 + $0x90] sm:$0xff]
  %v636 = vld [vmem:[%s4 + $0x98] sm:$0xff]
  %v637 = vadd.f32 %v595, %v597
  %638 = vadd.xlane.f32.xlu0 %v637
  %v639 = vpop.xlane.xlu0 %638
  %v640 = vadd.f32 %v601, %v603
  %641 = vadd.xlane.f32.xlu0 %v640
  %v642 = vpop.xlane.xlu0 %641
  %v643 = vadd.f32 %v607, %v609
  %644 = vadd.xlane.f32.xlu0 %v643
  %v645 = vpop.xlane.xlu0 %644
  %v646 = vadd.f32 %v613, %v615
  %647 = vadd.xlane.f32.xlu0 %v646
  %v648 = vpop.xlane.xlu0 %647
  %v649 = vadd.f32 %v639, %v645
  %v650 = vadd.f32 %v642, %v648
  %v651 = vmul.f32 %v649, 0.001953125
  %v652 = vmul.f32 %v650, 0.001953125
  %654 = vset.pattern.permute.xlu0 0
  %655 = vperm.xlu0 %654, %v651
  %v656 = vpop.permute.xlu0 %655
  %659 = vset.pattern.permute.xlu0 0
  %660 = vperm.xlu0 %659, %v652
  %v661 = vpop.permute.xlu0 %660
  %v663 = vsub.f32 %v595, %v656
  %v664 = vsub.f32 %v597, %v656
  %v665 = vsub.f32 %v601, %v661
  %v666 = vsub.f32 %v603, %v661
  %v667 = vsub.f32 %v607, %v656
  %v668 = vsub.f32 %v609, %v656
  %v669 = vsub.f32 %v613, %v661
  %v670 = vsub.f32 %v615, %v661
  %v671 = vmul.f32 %v663, %v663
  %v672 = vmul.f32 %v664, %v664
  %v673 = vmul.f32 %v665, %v665
  %v674 = vmul.f32 %v666, %v666
  %v675 = vmul.f32 %v667, %v667
  %v676 = vmul.f32 %v668, %v668
  %v677 = vmul.f32 %v669, %v669
  %v678 = vmul.f32 %v670, %v670
  %v679 = vadd.f32 %v671, %v672
  %680 = vadd.xlane.f32.xlu0 %v679
  %v681 = vpop.xlane.xlu0 %680
  %v682 = vadd.f32 %v673, %v674
  %683 = vadd.xlane.f32.xlu0 %v682
  %v684 = vpop.xlane.xlu0 %683
  %v685 = vadd.f32 %v675, %v676
  %686 = vadd.xlane.f32.xlu0 %v685
  %v687 = vpop.xlane.xlu0 %686
  %v688 = vadd.f32 %v677, %v678
  %689 = vadd.xlane.f32.xlu0 %v688
  %v690 = vpop.xlane.xlu0 %689
  %v691 = vadd.f32 %v681, %v687
  %v692 = vadd.f32 %v684, %v690
  %v693 = vmul.f32 %v691, 0.001953125
  %v694 = vmul.f32 %v692, 0.001953125
  %v695 = vadd.f32 %v693, 1e-05
  %v696 = vadd.f32 %v694, 1e-05
  %v697 = vrsqrt.pop %v695
  %v698 = vrsqrt.pop %v696
  %v699 = vmul.f32 %v617, %v697
  %v700 = vmul.f32 %v618, %v698
  %v701 = vmul.f32 %v619, %v697
  %v702 = vmul.f32 %v620, %v698
  %704 = vset.pattern.permute.xlu0 0
  %705 = vperm.xlu0 %704, %v699
  %v706 = vpop.permute.xlu0 %705
  %709 = vset.pattern.permute.xlu0 0
  %710 = vperm.xlu0 %709, %v700
  %v711 = vpop.permute.xlu0 %710
  %714 = vset.pattern.permute.xlu0 0
  %715 = vperm.xlu0 %714, %v701
  %v716 = vpop.permute.xlu0 %715
  %719 = vset.pattern.permute.xlu0 0
  %720 = vperm.xlu0 %719, %v702
  %v721 = vpop.permute.xlu0 %720
  %v723 = vmul.f32 %v663, %v706
  %v724 = vmul.f32 %v664, %v706
  %v725 = vmul.f32 %v665, %v711
  %v726 = vmul.f32 %v666, %v711
  %v727 = vmul.f32 %v667, %v716
  %v728 = vmul.f32 %v668, %v716
  %v729 = vmul.f32 %v669, %v721
  %v730 = vmul.f32 %v670, %v721
  %732 = vset.pattern.permute.xlu0 0
  %733 = vperm.xlu0 %732, %v621
  %v734 = vpop.permute.xlu0 %733
  %737 = vset.pattern.permute.xlu0 0
  %738 = vperm.xlu0 %737, %v622
  %v739 = vpop.permute.xlu0 %738
  %742 = vset.pattern.permute.xlu0 0
  %743 = vperm.xlu0 %742, %v623
  %v744 = vpop.permute.xlu0 %743
  %747 = vset.pattern.permute.xlu0 0
  %748 = vperm.xlu0 %747, %v624
  %v749 = vpop.permute.xlu0 %748
  %v751 = vadd.f32 %v723, %v734
  %v752 = vadd.f32 %v724, %v734
  %v753 = vadd.f32 %v725, %v739
  %v754 = vadd.f32 %v726, %v739
  %v755 = vadd.f32 %v727, %v744
  %v756 = vadd.f32 %v728, %v744
  %v757 = vadd.f32 %v729, %v749
  %v758 = vadd.f32 %v730, %v749
  %760 = vset.pattern.permute.xlu0 0
  %761 = vperm.xlu0 %760, %v625
  %v762 = vpop.permute.xlu0 %761
  %765 = vset.pattern.permute.xlu0 0
  %766 = vperm.xlu0 %765, %v626
  %v767 = vpop.permute.xlu0 %766
  %770 = vset.pattern.permute.xlu0 0
  %771 = vperm.xlu0 %770, %v627
  %v772 = vpop.permute.xlu0 %771
  %775 = vset.pattern.permute.xlu0 0
  %776 = vperm.xlu0 %775, %v628
  %v777 = vpop.permute.xlu0 %776
  %780 = vset.pattern.permute.xlu0 0
  %781 = vperm.xlu0 %780, %v629
  %v782 = vpop.permute.xlu0 %781
  %785 = vset.pattern.permute.xlu0 0
  %786 = vperm.xlu0 %785, %v630
  %v787 = vpop.permute.xlu0 %786
  %790 = vset.pattern.permute.xlu0 0
  %791 = vperm.xlu0 %790, %v631
  %v792 = vpop.permute.xlu0 %791
  %795 = vset.pattern.permute.xlu0 0
  %796 = vperm.xlu0 %795, %v632
  %v797 = vpop.permute.xlu0 %796
  %v800 = vsel %vm414, %v406, 0
  %v803 = vsel %vm414, %v407, 0
  %v806 = vsel %vm414, %v408, 0
  %v809 = vsel %vm414, %v409, 0
  %v812 = vsel %vm414, %v410, 0
  %v815 = vsel %vm414, %v411, 0
  %v818 = vsel %vm414, %v412, 0
  %v821 = vsel %vm414, %v413, 0
  %823 = vmatprep.subr.mxu0 %v752
  %824 = vmatpush1.msra.mxu0 %v751
  %825 = vmatprep.subr.mxu0 %v754
  %826 = vmatpush1.msra.mxu0 %v753
  %827 = vmatprep.subr.mxu0 %v756
  %828 = vmatpush1.msra.mxu0 %v755
  %829 = vmatprep.subr.mxu0 %v758
  %830 = vmatpush1.msra.mxu0 %v757
  %831 = vmatprep.subr.mxu0 0.0
  %832 = vmatpush1.msra.mxu0 0.0
  %833 = vmatprep.subr.mxu0 0.0
  %834 = vmatpush1.msra.mxu0 0.0
  %835 = vmatprep.subr.mxu0 0.0
  %836 = vmatpush1.msra.mxu0 0.0
  %837 = vmatprep.subr.mxu0 0.0
  %838 = vmatpush1.msra.mxu0 0.0
  %839 = vmatprep.subr.mxu0 0.0
  %840 = vmatpush1.msra.mxu0 0.0
  %841 = vmatprep.subr.mxu0 0.0
  %842 = vmatpush1.msra.mxu0 0.0
  %843 = vmatprep.subr.mxu0 0.0
  %844 = vmatpush1.msra.mxu0 0.0
  %845 = vmatprep.subr.mxu0 0.0
  %846 = vmatpush1.msra.mxu0 0.0
  %847 = vmatprep.subr.mxu0 0.0
  %848 = vmatpush1.msra.mxu0 0.0
  %849 = vmatprep.subr.mxu0 0.0
  %850 = vmatpush1.msra.mxu0 0.0
  %851 = vmatprep.subr.mxu0 0.0
  %852 = vmatpush1.msra.mxu0 0.0
  %853 = vmatprep.subr.mxu0 0.0
  %854 = vmatpush1.msra.mxu0 0.0
  %855 = vmatprep.subr.mxu0 0.0
  %856 = vmatpush1.msra.mxu0 0.0
  %857 = vmatprep.subr.mxu0 0.0
  %858 = vmatpush1.msra.mxu0 0.0
  %859 = vmatprep.subr.mxu0 0.0
  %860 = vmatpush1.msra.mxu0 0.0
  %861 = vmatprep.subr.mxu0 0.0
  %862 = vmatpush1.msra.mxu0 0.0
  %863 = vmatprep.subr.mxu0 0.0
  %864 = vmatpush1.msra.mxu0 0.0
  %865 = vmatprep.subr.mxu0 0.0
  %866 = vmatpush1.msra.mxu0 0.0
  %867 = vmatprep.subr.mxu0 0.0
  %868 = vmatpush1.msra.mxu0 0.0
  %869 = vmatprep.subr.mxu0 0.0
  %870 = vmatpush1.msra.mxu0 0.0
  %871 = vmatprep.subr.mxu0 0.0
  %872 = vmatpush1.msra.mxu0 0.0
  %873 = vmatprep.subr.mxu0 0.0
  %874 = vmatpush1.msra.mxu0 0.0
  %875 = vmatprep.subr.mxu0 0.0
  %876 = vmatpush1.msra.mxu0 0.0
  %877 = vmatprep.subr.mxu0 0.0
  %878 = vmatpush1.msra.mxu0 0.0
  %879 = vmatprep.subr.mxu0 0.0
  %880 = vmatpush1.msra.mxu0 0.0
  %881 = vmatprep.subr.mxu0 0.0
  %882 = vmatpush1.msra.mxu0 0.0
  %883 = vmatprep.subr.mxu0 0.0
  %884 = vmatpush1.msra.mxu0 0.0
  %885 = vmatprep.subr.mxu0 0.0
  %886 = vmatpush1.msra.mxu0 0.0
  %887 = vmatprep.mubr.f32.mxu0 0.0
  %888 = vmatmul.mubr.f32.gmra.mrb[0].mxu0 %v800
  %v889 = vpop.f32.mrb[0].mxu0
  %v890 = vadd.f32 %v762, %v889
  %v891 = vpop.f32.mrb[0].mxu0
  %v892 = vadd.f32 %v762, %v891
  %893 = vmatprep.mubr.f32.mxu0 0.0
  %894 = vmatmul.mubr.f32.gmra.mrb[0].mxu0 %v803
  %v895 = vpop.f32.mrb[0].mxu0
  %v896 = vadd.f32 %v767, %v895
  %v897 = vpop.f32.mrb[0].mxu0
  %v898 = vadd.f32 %v767, %v897
  %899 = vmatprep.mubr.f32.mxu0 0.0
  %900 = vmatmul.mubr.f32.gmra.mrb[0].mxu0 %v806
  %v901 = vpop.f32.mrb[0].mxu0
  %v902 = vadd.f32 %v772, %v901
  %v903 = vpop.f32.mrb[0].mxu0
  %v904 = vadd.f32 %v772, %v903
  %905 = vmatprep.mubr.f32.mxu0 0.0
  %906 = vmatmul.mubr.f32.gmra.mrb[0].mxu0 %v809
  %v907 = vpop.f32.mrb[0].mxu0
  %v908 = vadd.f32 %v777, %v907
  %v909 = vpop.f32.mrb[0].mxu0
  %v910 = vadd.f32 %v777, %v909
  %911 = vmatprep.mubr.f32.mxu0 0.0
  %912 = vmatmul.mubr.f32.gmra.mrb[0].mxu0 %v812
  %v913 = vpop.f32.mrb[0].mxu0
  %v914 = vadd.f32 %v782, %v913
  %v915 = vpop.f32.mrb[0].mxu0
  %v916 = vadd.f32 %v782, %v915
  %917 = vmatprep.mubr.f32.mxu0 0.0
  %918 = vmatmul.mubr.f32.gmra.mrb[0].mxu0 %v815
  %v919 = vpop.f32.mrb[0].mxu0
  %v920 = vadd.f32 %v787, %v919
  %v921 = vpop.f32.mrb[0].mxu0
  %v922 = vadd.f32 %v787, %v921
  %923 = vmatprep.mubr.f32.mxu0 0.0
  %924 = vmatmul.mubr.f32.gmra.mrb[0].mxu0 %v818
  %v925 = vpop.f32.mrb[0].mxu0
  %v926 = vadd.f32 %v792, %v925
  %v927 = vpop.f32.mrb[0].mxu0
  %v928 = vadd.f32 %v792, %v927
  %929 = vmatprep.mubr.f32.mxu0 0.0
  %930 = vmatmul.mubr.f32.gmra.mrb[0].mxu0 %v821
  %v931 = vpop.f32.mrb[0].mxu0
  %v932 = vadd.f32 %v797, %v931
  %v933 = vpop.f32.mrb[0].mxu0
  %v934 = vadd.f32 %v797, %v933
  %935 = vdwg.mxu0
  %v936 = vmul.f32 %v890, 0.5
  %v937 = vmul.f32 %v892, 0.5
  %v938 = vmul.f32 %v896, 0.5
  %v939 = vmul.f32 %v898, 0.5
  %v940 = vmul.f32 %v902, 0.5
  %v941 = vmul.f32 %v904, 0.5
  %v942 = vmul.f32 %v908, 0.5
  %v943 = vmul.f32 %v910, 0.5
  %v944 = vmul.f32 %v914, 0.5
  %v945 = vmul.f32 %v916, 0.5
  %v946 = vmul.f32 %v920, 0.5
  %v947 = vmul.f32 %v922, 0.5
  %v948 = vmul.f32 %v926, 0.5
  %v949 = vmul.f32 %v928, 0.5
  %v950 = vmul.f32 %v932, 0.5
  %v951 = vmul.f32 %v934, 0.5
  %v952 = vmul.f32 %v890, %v890
  %v953 = vmul.f32 %v892, %v892
  %v954 = vmul.f32 %v896, %v896
  %v955 = vmul.f32 %v898, %v898
  %v956 = vmul.f32 %v902, %v902
  %v957 = vmul.f32 %v904, %v904
  %v958 = vmul.f32 %v908, %v908
  %v959 = vmul.f32 %v910, %v910
  %v960 = vmul.f32 %v914, %v914
  %v961 = vmul.f32 %v916, %v916
  %v962 = vmul.f32 %v920, %v920
  %v963 = vmul.f32 %v922, %v922
  %v964 = vmul.f32 %v926, %v926
  %v965 = vmul.f32 %v928, %v928
  %v966 = vmul.f32 %v932, %v932
  %v967 = vmul.f32 %v934, %v934
  %v968 = vmul.f32 %v952, %v890
  %v969 = vmul.f32 %v953, %v892
  %v970 = vmul.f32 %v954, %v896
  %v971 = vmul.f32 %v955, %v898
  %v972 = vmul.f32 %v956, %v902
  %v973 = vmul.f32 %v957, %v904
  %v974 = vmul.f32 %v958, %v908
  %v975 = vmul.f32 %v959, %v910
  %v976 = vmul.f32 %v960, %v914
  %v977 = vmul.f32 %v961, %v916
  %v978 = vmul.f32 %v962, %v920
  %v979 = vmul.f32 %v963, %v922
  %v980 = vmul.f32 %v964, %v926
  %v981 = vmul.f32 %v965, %v928
  %v982 = vmul.f32 %v966, %v932
  %v983 = vmul.f32 %v967, %v934
  %v984 = vmul.f32 %v968, 0.044715
  %v985 = vmul.f32 %v969, 0.044715
  %v986 = vmul.f32 %v970, 0.044715
  %v987 = vmul.f32 %v971, 0.044715
  %v988 = vmul.f32 %v972, 0.044715
  %v989 = vmul.f32 %v973, 0.044715
  %v990 = vmul.f32 %v974, 0.044715
  %v991 = vmul.f32 %v975, 0.044715
  %v992 = vmul.f32 %v976, 0.044715
  %v993 = vmul.f32 %v977, 0.044715
  %v994 = vmul.f32 %v978, 0.044715
  %v995 = vmul.f32 %v979, 0.044715
  %v996 = vmul.f32 %v980, 0.044715
  %v997 = vmul.f32 %v981, 0.044715
  %v998 = vmul.f32 %v982, 0.044715
  %v999 = vmul.f32 %v983, 0.044715
  %v1000 = vadd.f32 %v890, %v984
  %v1001 = vadd.f32 %v892, %v985
  %v1002 = vadd.f32 %v896, %v986
  %v1003 = vadd.f32 %v898, %v987
  %v1004 = vadd.f32 %v902, %v988
  %v1005 = vadd.f32 %v904, %v989
  %v1006 = vadd.f32 %v908, %v990
  %v1007 = vadd.f32 %v910, %v991
  %v1008 = vadd.f32 %v914, %v992
  %v1009 = vadd.f32 %v916, %v993
  %v1010 = vadd.f32 %v920, %v994
  %v1011 = vadd.f32 %v922, %v995
  %v1012 = vadd.f32 %v926, %v996
  %v1013 = vadd.f32 %v928, %v997
  %v1014 = vadd.f32 %v932, %v998
  %v1015 = vadd.f32 %v934, %v999
  %v1016 = vmul.f32 %v1000, 0.7978846
  %v1017 = vmul.f32 %v1001, 0.7978846
  %v1018 = vmul.f32 %v1002, 0.7978846
  %v1019 = vmul.f32 %v1003, 0.7978846
  %v1020 = vmul.f32 %v1004, 0.7978846
  %v1021 = vmul.f32 %v1005, 0.7978846
  %v1022 = vmul.f32 %v1006, 0.7978846
  %v1023 = vmul.f32 %v1007, 0.7978846
  %v1024 = vmul.f32 %v1008, 0.7978846
  %v1025 = vmul.f32 %v1009, 0.7978846
  %v1026 = vmul.f32 %v1010, 0.7978846
  %v1027 = vmul.f32 %v1011, 0.7978846
  %v1028 = vmul.f32 %v1012, 0.7978846
  %v1029 = vmul.f32 %v1013, 0.7978846
  %v1030 = vmul.f32 %v1014, 0.7978846
  %v1031 = vmul.f32 %v1015, 0.7978846
  %v1032 = vtanh.pop %v1016
  %v1033 = vtanh.pop %v1017
  %v1034 = vtanh.pop %v1018
  %v1035 = vtanh.pop %v1019
  %v1036 = vtanh.pop %v1020
  %v1037 = vtanh.pop %v1021
  %v1038 = vtanh.pop %v1022
  %v1039 = vtanh.pop %v1023
  %v1040 = vtanh.pop %v1024
  %v1041 = vtanh.pop %v1025
  %v1042 = vtanh.pop %v1026
  %v1043 = vtanh.pop %v1027
  %v1044 = vtanh.pop %v1028
  %v1045 = vtanh.pop %v1029
  %v1046 = vtanh.pop %v1030
  %v1047 = vtanh.pop %v1031
  %v1048 = vadd.f32 %v1032, 1.0
  %v1049 = vadd.f32 %v1033, 1.0
  %v1050 = vadd.f32 %v1034, 1.0
  %v1051 = vadd.f32 %v1035, 1.0
  %v1052 = vadd.f32 %v1036, 1.0
  %v1053 = vadd.f32 %v1037, 1.0
  %v1054 = vadd.f32 %v1038, 1.0
  %v1055 = vadd.f32 %v1039, 1.0
  %v1056 = vadd.f32 %v1040, 1.0
  %v1057 = vadd.f32 %v1041, 1.0
  %v1058 = vadd.f32 %v1042, 1.0
  %v1059 = vadd.f32 %v1043, 1.0
  %v1060 = vadd.f32 %v1044, 1.0
  %v1061 = vadd.f32 %v1045, 1.0
  %v1062 = vadd.f32 %v1046, 1.0
  %v1063 = vadd.f32 %v1047, 1.0
  %v1064 = vmul.f32 %v936, %v1048
  %v1065 = vmul.f32 %v937, %v1049
  %v1066 = vmul.f32 %v938, %v1050
  %v1067 = vmul.f32 %v939, %v1051
  %v1068 = vmul.f32 %v940, %v1052
  %v1069 = vmul.f32 %v941, %v1053
  %v1070 = vmul.f32 %v942, %v1054
  %v1071 = vmul.f32 %v943, %v1055
  %v1072 = vmul.f32 %v944, %v1056
  %v1073 = vmul.f32 %v945, %v1057
  %v1074 = vmul.f32 %v946, %v1058
  %v1075 = vmul.f32 %v947, %v1059
  %v1076 = vmul.f32 %v948, %v1060
  %v1077 = vmul.f32 %v949, %v1061
  %v1078 = vmul.f32 %v950, %v1062
  %v1079 = vmul.f32 %v951, %v1063
  %v1080 = vld [vmem:[%s3] sm:$0xff]
  %v1081 = vld [vmem:[%s3 + $0x8] sm:$0xff]
  %v1082 = vld [vmem:[%s3 + $0x10] sm:$0xff]
  %v1083 = vld [vmem:[%s3 + $0x18] sm:$0xff]
  %1085 = vset.pattern.permute.xlu0 0
  %1086 = vperm.xlu0 %1085, %v633
  %v1087 = vpop.permute.xlu0 %1086
  %1090 = vset.pattern.permute.xlu0 0
  %1091 = vperm.xlu0 %1090, %v634
  %v1092 = vpop.permute.xlu0 %1091
  %1095 = vset.pattern.permute.xlu0 0
  %1096 = vperm.xlu0 %1095, %v635
  %v1097 = vpop.permute.xlu0 %1096
  %1100 = vset.pattern.permute.xlu0 0
  %1101 = vperm.xlu0 %1100, %v636
  %v1102 = vpop.permute.xlu0 %1101
  %vm1104 = vcmask 523264
  %v1106 = vsel %vm1104, %v1080, 0
  %v1109 = vsel %vm1104, %v1081, 0
  %v1112 = vsel %vm1104, %v1082, 0
  %v1115 = vsel %vm1104, %v1083, 0
  %1117 = vmatprep.subr.mxu0 %v1065
  %1118 = vmatpush1.msra.mxu0 %v1064
  %1119 = vmatprep.subr.mxu0 %v1067
  %1120 = vmatpush1.msra.mxu0 %v1066
  %1121 = vmatprep.subr.mxu0 %v1069
  %1122 = vmatpush1.msra.mxu0 %v1068
  %1123 = vmatprep.subr.mxu0 %v1071
  %1124 = vmatpush1.msra.mxu0 %v1070
  %1125 = vmatprep.subr.mxu0 %v1073
  %1126 = vmatpush1.msra.mxu0 %v1072
  %1127 = vmatprep.subr.mxu0 %v1075
  %1128 = vmatpush1.msra.mxu0 %v1074
  %1129 = vmatprep.subr.mxu0 %v1077
  %1130 = vmatpush1.msra.mxu0 %v1076
  %1131 = vmatprep.subr.mxu0 %v1079
  %1132 = vmatpush1.msra.mxu0 %v1078
  %1133 = vmatprep.subr.mxu0 0.0
  %1134 = vmatpush1.msra.mxu0 0.0
  %1135 = vmatprep.subr.mxu0 0.0
  %1136 = vmatpush1.msra.mxu0 0.0
  %1137 = vmatprep.subr.mxu0 0.0
  %1138 = vmatpush1.msra.mxu0 0.0
  %1139 = vmatprep.subr.mxu0 0.0
  %1140 = vmatpush1.msra.mxu0 0.0
  %1141 = vmatprep.subr.mxu0 0.0
  %1142 = vmatpush1.msra.mxu0 0.0
  %1143 = vmatprep.subr.mxu0 0.0
  %1144 = vmatpush1.msra.mxu0 0.0
  %1145 = vmatprep.subr.mxu0 0.0
  %1146 = vmatpush1.msra.mxu0 0.0
  %1147 = vmatprep.subr.mxu0 0.0
  %1148 = vmatpush1.msra.mxu0 0.0
  %1149 = vmatprep.subr.mxu0 0.0
  %1150 = vmatpush1.msra.mxu0 0.0
  %1151 = vmatprep.subr.mxu0 0.0
  %1152 = vmatpush1.msra.mxu0 0.0
  %1153 = vmatprep.subr.mxu0 0.0
  %1154 = vmatpush1.msra.mxu0 0.0
  %1155 = vmatprep.subr.mxu0 0.0
  %1156 = vmatpush1.msra.mxu0 0.0
  %1157 = vmatprep.subr.mxu0 0.0
  %1158 = vmatpush1.msra.mxu0 0.0
  %1159 = vmatprep.subr.mxu0 0.0
  %1160 = vmatpush1.msra.mxu0 0.0
  %1161 = vmatprep.subr.mxu0 0.0
  %1162 = vmatpush1.msra.mxu0 0.0
  %1163 = vmatprep.subr.mxu0 0.0
  %1164 = vmatpush1.msra.mxu0 0.0
  %1165 = vmatprep.subr.mxu0 0.0
  %1166 = vmatpush1.msra.mxu0 0.0
  %1167 = vmatprep.subr.mxu0 0.0
  %1168 = vmatpush1.msra.mxu0 0.0
  %1169 = vmatprep.subr.mxu0 0.0
  %1170 = vmatpush1.msra.mxu0 0.0
  %1171 = vmatprep.subr.mxu0 0.0
  %1172 = vmatpush1.msra.mxu0 0.0
  %1173 = vmatprep.subr.mxu0 0.0
  %1174 = vmatpush1.msra.mxu0 0.0
  %1175 = vmatprep.subr.mxu0 0.0
  %1176 = vmatpush1.msra.mxu0 0.0
  %1177 = vmatprep.subr.mxu0 0.0
  %1178 = vmatpush1.msra.mxu0 0.0
  %1179 = vmatprep.subr.mxu0 0.0
  %1180 = vmatpush1.msra.mxu0 0.0
  %1181 = vmatprep.mubr.f32.mxu0 0.0
  %1182 = vmatmul.mubr.f32.gmra.mrb[0].mxu0 %v1106
  %v1183 = vpop.f32.mrb[0].mxu0
  %v1184 = vadd.f32 %v1087, %v1183
  %v1185 = vpop.f32.mrb[0].mxu0
  %v1186 = vadd.f32 %v1087, %v1185
  %1187 = vmatprep.mubr.f32.mxu0 0.0
  %1188 = vmatmul.mubr.f32.gmra.mrb[0].mxu0 %v1109
  %v1189 = vpop.f32.mrb[0].mxu0
  %v1190 = vadd.f32 %v1092, %v1189
  %v1191 = vpop.f32.mrb[0].mxu0
  %v1192 = vadd.f32 %v1092, %v1191
  %1193 = vmatprep.mubr.f32.mxu0 0.0
  %1194 = vmatmul.mubr.f32.gmra.mrb[0].mxu0 %v1112
  %v1195 = vpop.f32.mrb[0].mxu0
  %v1196 = vadd.f32 %v1097, %v1195
  %v1197 = vpop.f32.mrb[0].mxu0
  %v1198 = vadd.f32 %v1097, %v1197
  %1199 = vmatprep.mubr.f32.mxu0 0.0
  %1200 = vmatmul.mubr.f32.gmra.mrb[0].mxu0 %v1115
  %v1201 = vpop.f32.mrb[0].mxu0
  %v1202 = vadd.f32 %v1102, %v1201
  %v1203 = vpop.f32.mrb[0].mxu0
  %v1204 = vadd.f32 %v1102, %v1203
  %1205 = vdwg.mxu0
  %1206 = vst [vmem:[%s5] sm:$0xff] %v1184
  %1207 = vst [vmem:[%s5 + $0x8] sm:$0xff] %v1186
  %1208 = vst [vmem:[%s5 + $0x10] sm:$0xff] %v1190
  %1209 = vst [vmem:[%s5 + $0x18] sm:$0xff] %v1192
  %1210 = vst [vmem:[%s5 + $0x20] sm:$0xff] %v1196
  %1211 = vst [vmem:[%s5 + $0x28] sm:$0xff] %v1198
  %1212 = vst [vmem:[%s5 + $0x30] sm:$0xff] %v1202
  %1213 = vst [vmem:[%s5 + $0x38] sm:$0xff] %v1204
  // Predicated region
  $region22: #{fourier_block.1} parent=0 // pred_check
    _
  $region23: #{fourier_block.1} parent=0 // pred_check_branch
    %1215 = sbr.rel (0) target = $region25
  $region24: #{fourier_block.1} parent=0 // pred_region
    _
  $region25: #{fourier_block.1} parent=0 // pred_fallthru
    _
  // Predicated region
  $region26: #{fourier_block.1} parent=0 // pred_check
    _
  $region27: #{fourier_block.1} parent=0 // pred_check_branch
    %1217 = sbr.rel (0) target = $region29
  $region28: #{fourier_block.1} parent=0 // pred_region
    _
  $region29: #{fourier_block.1} parent=0 // pred_fallthru
    _

</llo_original>
